<compile_context>
chip_gen: v5e
topology: v5e:2x2
jax: 0.10.0
libtpu: 0.0.40
codegen_flags: <defaults>
</compile_context>

<pallas_src>
import functools

import jax
import jax.numpy as jnp
from jax.experimental import pallas as pl
from jax.experimental.pallas import tpu as pltpu


_NUM_LAYERS = 4  # depth=2 -> enc C->C/2, enc C/2->C/4, dec C/4->C/2, dec C/2->C


def _round_up(x, m):
    return (x + m - 1) // m * m


# ---------------------------------------------------------------------------
# Pallas kernel: fused 4-layer channel AE + outer residual for one (C, TP)
# lane-dense tile.
# ---------------------------------------------------------------------------
def _channel_dae_kernel(x_ref, w_ref, b_ref, o_ref):
    """x_ref/o_ref: (C, TP) f32  (channels on sublanes, pixels on lanes)
       w_ref:       (4, C, C) bf16, each layer (Cout, Cin) zero-padded to CxC
       b_ref:       (4, C, 1) f32, zero-padded biases
    """
    x = x_ref[...]                                   # (C, TP) f32

    h = x
    for layer in range(_NUM_LAYERS):
        # MXU matmul: bf16 inputs, f32 accumulation.
        acc = jnp.dot(w_ref[layer], h.astype(jnp.bfloat16),
                      preferred_element_type=jnp.float32)      # (C, TP) f32
        acc = acc + b_ref[layer]                               # bias in f32
        if layer < _NUM_LAYERS - 1:
            acc = jnp.maximum(acc, 0.0)                        # ReLU in f32
        h = acc

    # Outer ChannelDAE residual: x + ae(x), in f32; lane-dense store.
    o_ref[...] = (x + h).astype(o_ref.dtype)


# ---------------------------------------------------------------------------
# Wrapper
# ---------------------------------------------------------------------------
def channel_dae_forward(x_nchw, wpack, bpack, *, tile_pix=2048):
    """ChannelDAE.forward(x) with on=True, residual=True.

    x_nchw: (N, C, H, W) float32
    wpack:  (4, C, C) bfloat16 packed/padded layer weights (Cout, Cin)
    bpack:  (4, C, 1) float32 packed/padded layer biases
    """
    n, c, h, w = x_nchw.shape
    hw = h * w

    # NCHW -> (N, C, H*W) is a free reshape: channels on sublanes, pixels on
    # the lane axis.  No NCHW<->NHWC transposes, no extra HBM round trips.
    x3d = x_nchw.reshape(n, c, hw)

    # Lane-dense tile (multiple of 128); pad the pixel axis so any N/H/W works
    # instead of asserting divisibility.
    tp = min(tile_pix, _round_up(hw, 128))
    hw_pad = _round_up(hw, tp)
    if hw_pad != hw:
        x3d = jnp.pad(x3d, ((0, 0), (0, 0), (0, hw_pad - hw)))

    grid = (n, hw_pad // tp)

    out3d = pl.pallas_call(
        _channel_dae_kernel,
        out_shape=jax.ShapeDtypeStruct((n, c, hw_pad), x_nchw.dtype),
        grid_spec=pltpu.PrefetchScalarGridSpec(
            num_scalar_prefetch=0,
            grid=grid,
            in_specs=[
                pl.BlockSpec((pl.Squeezed(), c, tp), lambda b, p: (b, 0, p)),
                pl.BlockSpec(wpack.shape, lambda b, p: (0, 0, 0)),  # resident
                pl.BlockSpec(bpack.shape, lambda b, p: (0, 0, 0)),  # resident
            ],
            out_specs=pl.BlockSpec((pl.Squeezed(), c, tp),
                                   lambda b, p: (b, 0, p)),
        ),
        compiler_params=pltpu.CompilerParams(
            dimension_semantics=("parallel", "parallel"),
            vmem_limit_bytes=32 * 1024 * 1024,
        ),
    )(x3d, wpack, bpack)

    return out3d[:, :, :hw].reshape(n, c, h, w)


# ---------------------------------------------------------------------------
# Pure-JAX reference (same math, same bf16 matmul precision, no Pallas).
# ---------------------------------------------------------------------------
def channel_dae_reference(x_nchw, wpack, bpack):
    n, c, h, w = x_nchw.shape
    xm = x_nchw.reshape(n, c, h * w).astype(jnp.float32)
    hcur = xm
    for layer in range(_NUM_LAYERS):
        acc = jnp.einsum("oc,ncp->nop", wpack[layer],
                         hcur.astype(jnp.bfloat16),
                         preferred_element_type=jnp.float32)
        acc = acc + bpack[layer]
        if layer < _NUM_LAYERS - 1:
            acc = jnp.maximum(acc, 0.0)
        hcur = acc
    return (xm + hcur).reshape(n, c, h, w)


# ---------------------------------------------------------------------------
# Deterministic parameter init (synthetic weights; no checkpoint loading).
# ---------------------------------------------------------------------------
def init_params(key, in_channels):
    c = in_channels
    dims = [(c, c // 2), (c // 2, c // 4), (c // 4, c // 2), (c // 2, c)]
    params = {}
    keys = jax.random.split(key, 2 * len(dims))
    for i, (din, dout) in enumerate(dims, start=1):
        kw, kb = keys[2 * (i - 1)], keys[2 * (i - 1) + 1]
        scale = (2.0 / din) ** 0.5
        # Weights already in (Cout, Cin) layout: layer is h = W @ x.
        params[f"w{i}"] = scale * jax.random.normal(kw, (dout, din), jnp.float32)
        params[f"b{i}"] = 0.1 * jax.random.normal(kb, (dout,), jnp.float32)
    return params


def pack_params(params, in_channels):
    """Zero-pad each layer to (C, C) / (C, 1) and stack into two operands."""
    c = in_channels
    wpack = jnp.zeros((_NUM_LAYERS, c, c), jnp.float32)
    bpack = jnp.zeros((_NUM_LAYERS, c, 1), jnp.float32)
    for i in range(_NUM_LAYERS):
        wi = params[f"w{i + 1}"]
        bi = params[f"b{i + 1}"]
        co, ci = wi.shape
        wpack = wpack.at[i, :co, :ci].set(wi)
        bpack = bpack.at[i, :co, 0].set(bi)
    return wpack.astype(jnp.bfloat16), bpack


if __name__ == "__main__":
    # ChannelDAE(in_channels=16, in_dim=16, swivel="layer3", depth=2,
    #            block_size=1, residual=True), self.on = True.
    N, C, H, W = 2, 16, 16, 16
    key = jax.random.PRNGKey(0)
    k_x, k_p = jax.random.split(key)

    x = jax.random.normal(k_x, (N, C, H, W), jnp.float32)
    params = init_params(k_p, C)
    wpack, bpack = pack_params(params, C)

    fwd = jax.jit(functools.partial(channel_dae_forward, tile_pix=2048))
    out = jax.block_until_ready(fwd(x, wpack, bpack))

    ref = channel_dae_reference(x, wpack, bpack)
    assert out.shape == x.shape and out.dtype == x.dtype
    assert jnp.allclose(out, ref, atol=1e-3, rtol=1e-3), "mismatch vs reference"

    print("KERNEL_OK")
</pallas_src>

<mosaic_0001>
module attributes {stable_mosaic.version = 11 : i64} {
  func.func @_channel_dae_kernel(%arg0: i32, %arg1: i32, %arg2: memref<1x16x256xf32, #tpu.memory_space<vmem>>, %arg3: memref<4x16x16xbf16, #tpu.memory_space<vmem>>, %arg4: memref<4x16x1xf32, #tpu.memory_space<vmem>>, %arg5: memref<1x16x256xf32, #tpu.memory_space<vmem>>) attributes {dimension_semantics = [#tpu.dimension_semantics<parallel>, #tpu.dimension_semantics<parallel>], iteration_bounds = array<i64: 2, 1>, scalar_prefetch = 0 : i64, scratch_operands = 0 : i64, tpu.core_type = #tpu.core_type<tc>, window_params = [{transform_indices = @transform_0, window_bounds = array<i64: 1, 16, 256>}, {pipeline_mode = #tpu.pipeline_mode<synchronous>, transform_indices = @transform_1, window_bounds = array<i64: 4, 16, 16>}, {pipeline_mode = #tpu.pipeline_mode<synchronous>, transform_indices = @transform_2, window_bounds = array<i64: 4, 16, 1>}, {transform_indices = @transform_3, window_bounds = array<i64: 1, 16, 256>}]} {
    %c0 = arith.constant 0 : index
    %c0_0 = arith.constant 0 : index
    %c0_1 = arith.constant 0 : index
    %0 = vector.load %arg2[%c0, %c0_0, %c0_1] : memref<1x16x256xf32, #tpu.memory_space<vmem>>, vector<1x16x256xf32>
    %1 = vector.shape_cast %0 : vector<1x16x256xf32> to vector<16x256xf32>
    %c0_2 = arith.constant 0 : index
    %c0_3 = arith.constant 0 : index
    %c0_4 = arith.constant 0 : index
    %2 = vector.load %arg3[%c0_2, %c0_3, %c0_4] : memref<4x16x16xbf16, #tpu.memory_space<vmem>>, vector<1x16x16xbf16>
    %3 = vector.shape_cast %2 : vector<1x16x16xbf16> to vector<16x16xbf16>
    %4 = arith.truncf %1 : vector<16x256xf32> to vector<16x256xbf16>
    %cst = arith.constant dense<0.000000e+00> : vector<16x256xf32>
    %5 = tpu.matmul %3, %4, %cst {dimension_numbers = #tpu.dot_dimension_numbers<[1], [0], [0], [1], [0, 0, 1, 1], [], []>} : vector<16x16xbf16>, vector<16x256xbf16>, vector<16x256xf32> -> vector<16x256xf32>
    %c0_5 = arith.constant 0 : index
    %c0_6 = arith.constant 0 : index
    %c0_7 = arith.constant 0 : index
    %6 = vector.load %arg4[%c0_5, %c0_6, %c0_7] : memref<4x16x1xf32, #tpu.memory_space<vmem>>, vector<1x16x1xf32>
    %7 = vector.shape_cast %6 : vector<1x16x1xf32> to vector<16x1xf32>
    %8 = vector.broadcast %7 : vector<16x1xf32> to vector<16x256xf32>
    %9 = arith.addf %5, %8 : vector<16x256xf32>
    %cst_8 = arith.constant 0.000000e+00 : f32
    %10 = vector.broadcast %cst_8 : f32 to vector<16x256xf32>
    %11 = arith.maximumf %9, %10 : vector<16x256xf32>
    %c1 = arith.constant 1 : index
    %c0_9 = arith.constant 0 : index
    %c0_10 = arith.constant 0 : index
    %12 = vector.load %arg3[%c1, %c0_9, %c0_10] : memref<4x16x16xbf16, #tpu.memory_space<vmem>>, vector<1x16x16xbf16>
    %13 = vector.shape_cast %12 : vector<1x16x16xbf16> to vector<16x16xbf16>
    %14 = arith.truncf %11 : vector<16x256xf32> to vector<16x256xbf16>
    %cst_11 = arith.constant dense<0.000000e+00> : vector<16x256xf32>
    %15 = tpu.matmul %13, %14, %cst_11 {dimension_numbers = #tpu.dot_dimension_numbers<[1], [0], [0], [1], [0, 0, 1, 1], [], []>} : vector<16x16xbf16>, vector<16x256xbf16>, vector<16x256xf32> -> vector<16x256xf32>
    %c1_12 = arith.constant 1 : index
    %c0_13 = arith.constant 0 : index
    %c0_14 = arith.constant 0 : index
    %16 = vector.load %arg4[%c1_12, %c0_13, %c0_14] : memref<4x16x1xf32, #tpu.memory_space<vmem>>, vector<1x16x1xf32>
    %17 = vector.shape_cast %16 : vector<1x16x1xf32> to vector<16x1xf32>
    %18 = vector.broadcast %17 : vector<16x1xf32> to vector<16x256xf32>
    %19 = arith.addf %15, %18 : vector<16x256xf32>
    %cst_15 = arith.constant 0.000000e+00 : f32
    %20 = vector.broadcast %cst_15 : f32 to vector<16x256xf32>
    %21 = arith.maximumf %19, %20 : vector<16x256xf32>
    %c2 = arith.constant 2 : index
    %c0_16 = arith.constant 0 : index
    %c0_17 = arith.constant 0 : index
    %22 = vector.load %arg3[%c2, %c0_16, %c0_17] : memref<4x16x16xbf16, #tpu.memory_space<vmem>>, vector<1x16x16xbf16>
    %23 = vector.shape_cast %22 : vector<1x16x16xbf16> to vector<16x16xbf16>
    %24 = arith.truncf %21 : vector<16x256xf32> to vector<16x256xbf16>
    %cst_18 = arith.constant dense<0.000000e+00> : vector<16x256xf32>
    %25 = tpu.matmul %23, %24, %cst_18 {dimension_numbers = #tpu.dot_dimension_numbers<[1], [0], [0], [1], [0, 0, 1, 1], [], []>} : vector<16x16xbf16>, vector<16x256xbf16>, vector<16x256xf32> -> vector<16x256xf32>
    %c2_19 = arith.constant 2 : index
    %c0_20 = arith.constant 0 : index
    %c0_21 = arith.constant 0 : index
    %26 = vector.load %arg4[%c2_19, %c0_20, %c0_21] : memref<4x16x1xf32, #tpu.memory_space<vmem>>, vector<1x16x1xf32>
    %27 = vector.shape_cast %26 : vector<1x16x1xf32> to vector<16x1xf32>
    %28 = vector.broadcast %27 : vector<16x1xf32> to vector<16x256xf32>
    %29 = arith.addf %25, %28 : vector<16x256xf32>
    %cst_22 = arith.constant 0.000000e+00 : f32
    %30 = vector.broadcast %cst_22 : f32 to vector<16x256xf32>
    %31 = arith.maximumf %29, %30 : vector<16x256xf32>
    %c3 = arith.constant 3 : index
    %c0_23 = arith.constant 0 : index
    %c0_24 = arith.constant 0 : index
    %32 = vector.load %arg3[%c3, %c0_23, %c0_24] : memref<4x16x16xbf16, #tpu.memory_space<vmem>>, vector<1x16x16xbf16>
    %33 = vector.shape_cast %32 : vector<1x16x16xbf16> to vector<16x16xbf16>
    %34 = arith.truncf %31 : vector<16x256xf32> to vector<16x256xbf16>
    %cst_25 = arith.constant dense<0.000000e+00> : vector<16x256xf32>
    %35 = tpu.matmul %33, %34, %cst_25 {dimension_numbers = #tpu.dot_dimension_numbers<[1], [0], [0], [1], [0, 0, 1, 1], [], []>} : vector<16x16xbf16>, vector<16x256xbf16>, vector<16x256xf32> -> vector<16x256xf32>
    %c3_26 = arith.constant 3 : index
    %c0_27 = arith.constant 0 : index
    %c0_28 = arith.constant 0 : index
    %36 = vector.load %arg4[%c3_26, %c0_27, %c0_28] : memref<4x16x1xf32, #tpu.memory_space<vmem>>, vector<1x16x1xf32>
    %37 = vector.shape_cast %36 : vector<1x16x1xf32> to vector<16x1xf32>
    %38 = vector.broadcast %37 : vector<16x1xf32> to vector<16x256xf32>
    %39 = arith.addf %35, %38 : vector<16x256xf32>
    %40 = arith.addf %1, %39 : vector<16x256xf32>
    %c0_29 = arith.constant 0 : index
    %c0_30 = arith.constant 0 : index
    %c0_31 = arith.constant 0 : index
    %41 = vector.load %arg5[%c0_29, %c0_30, %c0_31] : memref<1x16x256xf32, #tpu.memory_space<vmem>>, vector<1x16x256xf32>
    %42 = vector.shape_cast %41 : vector<1x16x256xf32> to vector<16x256xf32>
    %43 = vector.shape_cast %40 : vector<16x256xf32> to vector<1x16x256xf32>
    tpu.vector_store %arg5[%c0_29, %c0_30, %c0_31], %43 {strides = array<i32>} : memref<1x16x256xf32, #tpu.memory_space<vmem>>, vector<1x16x256xf32>,
    return
  }
  func.func @transform_0(%arg0: i32, %arg1: i32) -> (i32, i32, i32) {
    %c0_i32 = arith.constant 0 : i32
    %c0_i32_0 = arith.constant 0 : i32
    return %arg0, %c0_i32, %arg1 : i32, i32, i32
  }
  func.func @transform_1(%arg0: i32, %arg1: i32) -> (i32, i32, i32) {
    %c0_i32 = arith.constant 0 : i32
    %c0_i32_0 = arith.constant 0 : i32
    %c0_i32_1 = arith.constant 0 : i32
    %c0_i32_2 = arith.constant 0 : i32
    return %c0_i32, %c0_i32_0, %c0_i32_1 : i32, i32, i32
  }
  func.func @transform_2(%arg0: i32, %arg1: i32) -> (i32, i32, i32) {
    %c0_i32 = arith.constant 0 : i32
    %c0_i32_0 = arith.constant 0 : i32
    %c0_i32_1 = arith.constant 0 : i32
    %c0_i32_2 = arith.constant 0 : i32
    return %c0_i32, %c0_i32_0, %c0_i32_1 : i32, i32, i32
  }
  func.func @transform_3(%arg0: i32, %arg1: i32) -> (i32, i32, i32) {
    %c0_i32 = arith.constant 0 : i32
    %c0_i32_0 = arith.constant 0 : i32
    return %arg0, %c0_i32, %arg1 : i32, i32, i32
  }
}

</mosaic_0001>

<llo_original>
// kernel: channel_dae_forward.1
$region0: #{channel_dae_forward.1}
  #allocation0 [shape = 'u32[]', space=smem, size = 0x4, offset = 0x4, fixed_abs, tag = 'smem constant byte address 0x4 - core index']
  #allocation1 [shape = 'u32[72,128]{1,0:T(1,128)}', space=vmem, size = 0x9000, scoped, tag = 'internal scratch']
  %s0 = inlined_call_operand.vmem [shape: f32[2,16,256], index: 0, kind: input, shape index: {}]
  %s1 = inlined_call_operand.vmem [shape: bf16[4,16,16], index: 1, kind: input, shape index: {}]
  %s2 = inlined_call_operand.vmem [shape: f32[4,16,1], index: 2, kind: input, shape index: {}]
  %s3 = inlined_call_operand.vmem [shape: f32[2,16,256], index: 3, kind: output, shape index: {}]
  %s4 = sld [smem:[#allocation0]]
  $region45: #{channel_dae_forward.1} parent=0
    _
  %s6 = ssub.s32 1, %s4
  %s7 = scalar_select 0, %s6, %s4
  loop: start=0, step=1, limit=4
  $region2: #{channel_dae_forward.1} parent=0 // loop_pre_header
    _
  $region3: #{channel_dae_forward.1} parent=0 // loop_header
    %s9 = sphi 0, %s13
    %p10 = scmp.ge.s32.totalorder %s9, 4
    %s16 = sphi 0, %s28
    %s17 = sphi 0, %s24
    %s18 = sphi 0, %s16
    %s19 = sphi 0, %s17
    %s20 = sphi 0, %s18
    %s21 = sphi 0, %s19
    %s33 = sphi 0, %s35
    %s36 = sphi 0, %s33
    %s37 = sphi 0, %s36
    %s53 = sphi 0, %s37
    %s57 = sphi 0, %s57
    %s59 = sphi 0, %s57
    %s60 = sphi 0, %s59
    %s74 = sphi 0, %s60
    %s78 = sphi 0, %s78
    %s80 = sphi 0, %s78
    %s81 = sphi 0, %s80
    %s95 = sphi 0, %s81
    %s103 = sphi 0, %s105
    %s106 = sphi 0, %s103
    %s107 = sphi 0, %s106
    %s123 = sphi 0, %s107
  $region4: #{channel_dae_forward.1} parent=0 // loop_header_branch
    %12 = sbr.rel (%p10) target = $region8
  $region5: #{channel_dae_forward.1} parent=0 // loop_body
    %s14 = ssub.s32 %s9, 1
    %s15 = ssub.s32 %s9, 2
    %s22 = sadd.s32 1, %s17
    %p23 = scmp.ge.s32.totalorder %s22, 1
    %s24 = scalar_select %p23, 0, %s22
    %s25 = sadd.s32 1, %s16
    %s26 = scalar_select %p23, %s25, %s16
    %p27 = scmp.ge.s32.totalorder %s26, 2
    %s28 = scalar_select %p27, 0, %s26
    %s29 = ssub.s32 %s16, %s28
    %s30 = ssub.s32 %s17, %s24
    %s31 = sor.u32 %s29, %s30
    %p32 = scmp.eq.s32.totalorder %s31, 0
    %s34 = sadd.s32 %s33, 1
    %s35 = scalar_select %p32, %s33, %s34
    %p38 = pneg %p32
    %p39 = scmp.eq.s32.totalorder %s9, 1
    %p40 = por %p38, %p39
    %p41 = scmp.ne.s32.totalorder %s33, %s36
    %p42 = scmp.eq.s32.totalorder %s9, 0
    %p43 = por %p41, %p42
    %p44 = scmp.ne.s32.totalorder %s33, %s36
    %p45 = scmp.eq.s32.totalorder %s14, 1
    %p46 = por %p44, %p45
    %p47 = scmp.ne.s32.totalorder %s36, %s37
    %p48 = scmp.eq.s32.totalorder %s14, 0
    %p49 = por %p47, %p48
    %p50 = scmp.ne.s32.totalorder %s36, %s37
    %p51 = scmp.eq.s32.totalorder %s15, 1
    %p52 = por %p50, %p51
    %p54 = scmp.ne.s32.totalorder %s37, %s53
    %p55 = scmp.eq.s32.totalorder %s15, 0
    %p56 = por %p54, %p55
    %s58 = sadd.s32 %s57, 1
    %p61 = scmp.eq.s32.totalorder %s9, 1
    %p62 = scmp.ne.s32.totalorder %s57, %s59
    %p63 = scmp.eq.s32.totalorder %s9, 0
    %p64 = por %p62, %p63
    %p65 = scmp.ne.s32.totalorder %s57, %s59
    %p66 = scmp.eq.s32.totalorder %s14, 1
    %p67 = por %p65, %p66
    %p68 = scmp.ne.s32.totalorder %s59, %s60
    %p69 = scmp.eq.s32.totalorder %s14, 0
    %p70 = por %p68, %p69
    %p71 = scmp.ne.s32.totalorder %s59, %s60
    %p72 = scmp.eq.s32.totalorder %s15, 1
    %p73 = por %p71, %p72
    %p75 = scmp.ne.s32.totalorder %s60, %s74
    %p76 = scmp.eq.s32.totalorder %s15, 0
    %p77 = por %p75, %p76
    %s79 = sadd.s32 %s78, 1
    %p82 = scmp.eq.s32.totalorder %s9, 1
    %p83 = scmp.ne.s32.totalorder %s78, %s80
    %p84 = scmp.eq.s32.totalorder %s9, 0
    %p85 = por %p83, %p84
    %p86 = scmp.ne.s32.totalorder %s78, %s80
    %p87 = scmp.eq.s32.totalorder %s14, 1
    %p88 = por %p86, %p87
    %p89 = scmp.ne.s32.totalorder %s80, %s81
    %p90 = scmp.eq.s32.totalorder %s14, 0
    %p91 = por %p89, %p90
    %p92 = scmp.ne.s32.totalorder %s80, %s81
    %p93 = scmp.eq.s32.totalorder %s15, 1
    %p94 = por %p92, %p93
    %p96 = scmp.ne.s32.totalorder %s81, %s95
    %p97 = scmp.eq.s32.totalorder %s15, 0
    %p98 = por %p96, %p97
    %s99 = ssub.s32 %s16, %s28
    %s100 = ssub.s32 %s17, %s24
    %s101 = sor.u32 %s99, %s100
    %p102 = scmp.eq.s32.totalorder %s101, 0
    %s104 = sadd.s32 %s103, 1
    %s105 = scalar_select %p102, %s103, %s104
    %p108 = pneg %p102
    %p109 = scmp.eq.s32.totalorder %s9, 1
    %p110 = por %p108, %p109
    %p111 = scmp.ne.s32.totalorder %s103, %s106
    %p112 = scmp.eq.s32.totalorder %s9, 0
    %p113 = por %p111, %p112
    %p114 = scmp.ne.s32.totalorder %s103, %s106
    %p115 = scmp.eq.s32.totalorder %s14, 1
    %p116 = por %p114, %p115
    %p117 = scmp.ne.s32.totalorder %s106, %s107
    %p118 = scmp.eq.s32.totalorder %s14, 0
    %p119 = por %p117, %p118
    %p120 = scmp.ne.s32.totalorder %s106, %s107
    %p121 = scmp.eq.s32.totalorder %s15, 1
    %p122 = por %p120, %p121
    %p124 = scmp.ne.s32.totalorder %s107, %s123
    %p125 = scmp.eq.s32.totalorder %s15, 0
    %p126 = por %p124, %p125
    %p127 = scmp.le.s32.totalorder 1, %s9
    %p128 = scmp.lt.s32.totalorder %s9, 3
    %p129 = pnand %p127, %p128
    %p130 = pneg %p129
    // Predicated region
    $region9: #{channel_dae_forward.1} parent=5 // pred_check
      _
    $region10: #{channel_dae_forward.1} parent=5 // pred_check_branch
      %132 = sbr.rel (%p129) target = $region12
    $region11: #{channel_dae_forward.1} parent=5 // pred_region
      %s133 = ssub.s32 %s9, 1
      // Predicated region
      $region13: #{channel_dae_forward.1} parent=11 // pred_check
        %p134 = pneg %p70
      $region14: #{channel_dae_forward.1} parent=11 // pred_check_branch
        %136 = sbr.rel (%p134) target = $region16
      $region15: #{channel_dae_forward.1} parent=11 // pred_region
        _
      $region16: #{channel_dae_forward.1} parent=11 // pred_fallthru
        _
      // Predicated region
      $region17: #{channel_dae_forward.1} parent=11 // pred_check
        %p137 = pneg %p91
      $region18: #{channel_dae_forward.1} parent=11 // pred_check_branch
        %139 = sbr.rel (%p137) target = $region20
      $region19: #{channel_dae_forward.1} parent=11 // pred_region
        _
      $region20: #{channel_dae_forward.1} parent=11 // pred_fallthru
        _
    $region12: #{channel_dae_forward.1} parent=5 // pred_fallthru
      _
    %p140 = scmp.lt.s32.totalorder %s9, 2
    // Predicated region
    $region21: #{channel_dae_forward.1} parent=5 // pred_check
      %p141 = pneg %p140
    $region22: #{channel_dae_forward.1} parent=5 // pred_check_branch
      %143 = sbr.rel (%p141) target = $region24
    $region23: #{channel_dae_forward.1} parent=5 // pred_region
      // Predicated region
      $region25: #{channel_dae_forward.1} parent=23 // pred_check
        %p144 = pneg %p43
      $region26: #{channel_dae_forward.1} parent=23 // pred_check_branch
        %146 = sbr.rel (%p144) target = $region28
      $region27: #{channel_dae_forward.1} parent=23 // pred_region
        %s147 = smul.u32 2, %s17
        %p148 = scmp.lt.s32.totalorder %s16, 1
        %s149 = scalar_select %p148, %s16, 1
        %p150 = scmp.lt.s32.totalorder %s147, 1
        %s151 = scalar_select %p150, %s147, 1
        %s152 = smul.addr %s149, 4
        %s153 = sadd.s32 %s151, %s152
        %s154 = smul.addr %s153, 8
        %s155 = scalar_lea.vmem %s0, %s154
        %s156 = smul.u32 2, %s17
      $region28: #{channel_dae_forward.1} parent=23 // pred_fallthru
        _
    $region24: #{channel_dae_forward.1} parent=5 // pred_fallthru
      _
    %p157 = scmp.le.s32.totalorder 1, %s9
    %p158 = scmp.lt.s32.totalorder %s9, 3
    %p159 = pnand %p157, %p158
    %p160 = pneg %p159
    // Predicated region
    $region29: #{channel_dae_forward.1} parent=5 // pred_check
      _
    $region30: #{channel_dae_forward.1} parent=5 // pred_check_branch
      %162 = sbr.rel (%p159) target = $region32
    $region31: #{channel_dae_forward.1} parent=5 // pred_region
      %s163 = ssub.s32 %s9, 1
      %s164 = smul.u32 2, %s19
      %p165 = scmp.lt.s32.totalorder %s18, 1
      %s166 = scalar_select %p165, %s18, 1
      %p167 = scmp.lt.s32.totalorder %s164, 1
      %s168 = scalar_select %p167, %s164, 1
      %s169 = smul.addr %s166, 4
      %s170 = sadd.s32 %s168, %s169
      %s171 = smul.addr %s170, 8
      %s172 = scalar_lea.vmem %s0, %s171
      %p173 = pneg %p49
      %p174 = pneg %p46
      %p175 = pneg %p70
      %p176 = pneg %p67
      %p177 = pneg %p91
      %p178 = pneg %p88
      %p179 = pneg %p119
      %p180 = pneg %p116
      %s181 = smul.u32 2, %s19
      %p182 = scmp.lt.s32.totalorder %s18, 1
      %s183 = scalar_select %p182, %s18, 1
      %p184 = scmp.lt.s32.totalorder %s181, 1
      %s185 = scalar_select %p184, %s181, 1
      %s186 = smul.addr %s183, 4
      %s187 = sadd.s32 %s185, %s186
      %s188 = smul.addr %s187, 8
      %s189 = scalar_lea.vmem %s3, %s188
      %s190 = smul.u32 2, %s19
      %p191 = scmp.lt.s32.totalorder %s18, 1
      %s192 = scalar_select %p191, %s18, 1
      %p193 = scmp.lt.s32.totalorder %s190, 1
      %s194 = scalar_select %p193, %s190, 1
      %s195 = smul.addr %s192, 4
      %s196 = sadd.s32 %s194, %s195
      %s197 = smul.addr %s196, 8
      %s198 = scalar_lea.vmem %s0, %s197
      %s199 = smul.u32 2, %s19
      %s200 = smul.u32 2, %s19
      %p201 = scmp.lt.s32.totalorder %s18, 1
      %s202 = scalar_select %p201, %s18, 1
      %p203 = scmp.lt.s32.totalorder %s200, 1
      %s204 = scalar_select %p203, %s200, 1
      %s205 = smul.addr %s202, 4
      %s206 = sadd.s32 %s204, %s205
      %s207 = smul.addr %s206, 8
      %s208 = scalar_lea.vmem %s3, %s207
      %s209 = smul.u32 2, %s19
      %v211 = vld [vmem:[%s198] sm:$0xff]
      %v212 = vld [vmem:[%s198 + $0x8] sm:$0xff]
      %v213 = vld [vmem:[%s198 + $0x10] sm:$0xff]
      %v214 = vld [vmem:[%s198 + $0x18] sm:$0xff]
      %v215 = vld [vmem:[%s1] sm:$0xf]
      %v216 = vld [vmem:[%s1 + $0x4] sm:$0xf]
      %v217 = vpack.c.bf16 %v213, %v211
      %v218 = vpack.c.bf16 %v214, %v212
      %v219 = vld [vmem:[%s2] sm:$0xff]
      %v220 = vld [vmem:[%s2 + $0x8] sm:$0xff]
      %222 = vset.pattern.permute.xlu0 0
      %223 = vperm.xlu0 %222, %v219
      %v224 = vpop.permute.xlu0 %223
      %227 = vset.pattern.permute.xlu0 0
      %228 = vperm.xlu0 %227, %v220
      %v229 = vpop.permute.xlu0 %228
      %v233 = vunpack.c.l.b16 %v215
      %v234 = vunpack.c.l.b16 %v216
      %v235 = vpack.c.b16 %v234, %v233
      %vm236 = vcmask 130048
      %v238 = vsel %vm236, %v235, 0
      %240 = vmatpush.bf16.msra.mxu0 0
      %241 = vmatpush.bf16.msra.mxu0 0
      %242 = vmatpush.bf16.msra.mxu0 0
      %243 = vmatpush.bf16.msra.mxu0 0
      %244 = vmatpush.bf16.msra.mxu0 0
      %245 = vmatpush.bf16.msra.mxu0 0
      %246 = vmatpush.bf16.msra.mxu0 0
      %247 = vmatpush.bf16.msra.mxu0 %v217
      %248 = vmatmul.bf16.gmra.mxu0 %v238
      %v249 = vpop.f32.mrf.mxu0
      %v250 = vadd.f32 %v224, %v249
      %v251 = vpop.f32.mrf.mxu0
      %v252 = vadd.f32 %v229, %v251
      %253 = vdwg.mxu0
      %254 = vmatpush.bf16.msra.mxu0 0
      %255 = vmatpush.bf16.msra.mxu0 0
      %256 = vmatpush.bf16.msra.mxu0 0
      %257 = vmatpush.bf16.msra.mxu0 0
      %258 = vmatpush.bf16.msra.mxu0 0
      %259 = vmatpush.bf16.msra.mxu0 0
      %260 = vmatpush.bf16.msra.mxu0 0
      %261 = vmatpush.bf16.msra.mxu0 %v218
      %262 = vmatmul.bf16.gmra.mxu0 %v238
      %v263 = vpop.f32.mrf.mxu0
      %v264 = vadd.f32 %v224, %v263
      %v265 = vpop.f32.mrf.mxu0
      %v266 = vadd.f32 %v229, %v265
      %267 = vdwg.mxu0
      %v268 = vmax.f32 %v250, 0.0
      %v269 = vmax.f32 %v264, 0.0
      %v270 = vmax.f32 %v252, 0.0
      %v271 = vmax.f32 %v266, 0.0
      %s272 = scalar_lea.vmem %s1, 8
      %v273 = vld [vmem:[%s272] sm:$0xf]
      %v274 = vld [vmem:[%s272 + $0x4] sm:$0xf]
      %v275 = vpack.c.bf16 %v270, %v268
      %v276 = vpack.c.bf16 %v271, %v269
      %s277 = scalar_lea.vmem %s2, 16
      %v278 = vld [vmem:[%s277] sm:$0xff]
      %v279 = vld [vmem:[%s277 + $0x8] sm:$0xff]
      %281 = vset.pattern.permute.xlu0 0
      %282 = vperm.xlu0 %281, %v278
      %v283 = vpop.permute.xlu0 %282
      %286 = vset.pattern.permute.xlu0 0
      %287 = vperm.xlu0 %286, %v279
      %v288 = vpop.permute.xlu0 %287
      %v292 = vunpack.c.l.b16 %v273
      %v293 = vunpack.c.l.b16 %v274
      %v294 = vpack.c.b16 %v293, %v292
      %v296 = vsel %vm236, %v294, 0
      %298 = vmatpush.bf16.msra.mxu0 0
      %299 = vmatpush.bf16.msra.mxu0 0
      %300 = vmatpush.bf16.msra.mxu0 0
      %301 = vmatpush.bf16.msra.mxu0 0
      %302 = vmatpush.bf16.msra.mxu0 0
      %303 = vmatpush.bf16.msra.mxu0 0
      %304 = vmatpush.bf16.msra.mxu0 0
      %305 = vmatpush.bf16.msra.mxu0 %v275
      %306 = vmatmul.bf16.gmra.mxu0 %v296
      %v307 = vpop.f32.mrf.mxu0
      %v308 = vadd.f32 %v283, %v307
      %v309 = vpop.f32.mrf.mxu0
      %v310 = vadd.f32 %v288, %v309
      %311 = vdwg.mxu0
      %312 = vmatpush.bf16.msra.mxu0 0
      %313 = vmatpush.bf16.msra.mxu0 0
      %314 = vmatpush.bf16.msra.mxu0 0
      %315 = vmatpush.bf16.msra.mxu0 0
      %316 = vmatpush.bf16.msra.mxu0 0
      %317 = vmatpush.bf16.msra.mxu0 0
      %318 = vmatpush.bf16.msra.mxu0 0
      %319 = vmatpush.bf16.msra.mxu0 %v276
      %320 = vmatmul.bf16.gmra.mxu0 %v296
      %v321 = vpop.f32.mrf.mxu0
      %v322 = vadd.f32 %v283, %v321
      %v323 = vpop.f32.mrf.mxu0
      %v324 = vadd.f32 %v288, %v323
      %325 = vdwg.mxu0
      %v326 = vmax.f32 %v308, 0.0
      %v327 = vmax.f32 %v322, 0.0
      %v328 = vmax.f32 %v310, 0.0
      %v329 = vmax.f32 %v324, 0.0
      %s330 = scalar_lea.vmem %s1, 16
      %v331 = vld [vmem:[%s330] sm:$0xf]
      %v332 = vld [vmem:[%s330 + $0x4] sm:$0xf]
      %v333 = vpack.c.bf16 %v328, %v326
      %v334 = vpack.c.bf16 %v329, %v327
      %s335 = scalar_lea.vmem %s2, 32
      %v336 = vld [vmem:[%s335] sm:$0xff]
      %v337 = vld [vmem:[%s335 + $0x8] sm:$0xff]
      %339 = vset.pattern.permute.xlu0 0
      %340 = vperm.xlu0 %339, %v336
      %v341 = vpop.permute.xlu0 %340
      %344 = vset.pattern.permute.xlu0 0
      %345 = vperm.xlu0 %344, %v337
      %v346 = vpop.permute.xlu0 %345
      %v350 = vunpack.c.l.b16 %v331
      %v351 = vunpack.c.l.b16 %v332
      %v352 = vpack.c.b16 %v351, %v350
      %v354 = vsel %vm236, %v352, 0
      %356 = vmatpush.bf16.msra.mxu0 0
      %357 = vmatpush.bf16.msra.mxu0 0
      %358 = vmatpush.bf16.msra.mxu0 0
      %359 = vmatpush.bf16.msra.mxu0 0
      %360 = vmatpush.bf16.msra.mxu0 0
      %361 = vmatpush.bf16.msra.mxu0 0
      %362 = vmatpush.bf16.msra.mxu0 0
      %363 = vmatpush.bf16.msra.mxu0 %v333
      %364 = vmatmul.bf16.gmra.mxu0 %v354
      %v365 = vpop.f32.mrf.mxu0
      %v366 = vadd.f32 %v341, %v365
      %v367 = vpop.f32.mrf.mxu0
      %v368 = vadd.f32 %v346, %v367
      %369 = vdwg.mxu0
      %370 = vmatpush.bf16.msra.mxu0 0
      %371 = vmatpush.bf16.msra.mxu0 0
      %372 = vmatpush.bf16.msra.mxu0 0
      %373 = vmatpush.bf16.msra.mxu0 0
      %374 = vmatpush.bf16.msra.mxu0 0
      %375 = vmatpush.bf16.msra.mxu0 0
      %376 = vmatpush.bf16.msra.mxu0 0
      %377 = vmatpush.bf16.msra.mxu0 %v334
      %378 = vmatmul.bf16.gmra.mxu0 %v354
      %v379 = vpop.f32.mrf.mxu0
      %v380 = vadd.f32 %v341, %v379
      %v381 = vpop.f32.mrf.mxu0
      %v382 = vadd.f32 %v346, %v381
      %383 = vdwg.mxu0
      %v384 = vmax.f32 %v366, 0.0
      %v385 = vmax.f32 %v380, 0.0
      %v386 = vmax.f32 %v368, 0.0
      %v387 = vmax.f32 %v382, 0.0
      %s388 = scalar_lea.vmem %s1, 24
      %v389 = vld [vmem:[%s388] sm:$0xf]
      %v390 = vld [vmem:[%s388 + $0x4] sm:$0xf]
      %v391 = vpack.c.bf16 %v386, %v384
      %v392 = vpack.c.bf16 %v387, %v385
      %s393 = scalar_lea.vmem %s2, 48
      %v394 = vld [vmem:[%s393] sm:$0xff]
      %v395 = vld [vmem:[%s393 + $0x8] sm:$0xff]
      %397 = vset.pattern.permute.xlu0 0
      %398 = vperm.xlu0 %397, %v394
      %v399 = vpop.permute.xlu0 %398
      %402 = vset.pattern.permute.xlu0 0
      %403 = vperm.xlu0 %402, %v395
      %v404 = vpop.permute.xlu0 %403
      %v408 = vunpack.c.l.b16 %v389
      %v409 = vunpack.c.l.b16 %v390
      %v410 = vpack.c.b16 %v409, %v408
      %v412 = vsel %vm236, %v410, 0
      %414 = vmatpush.bf16.msra.mxu0 0
      %415 = vmatpush.bf16.msra.mxu0 0
      %416 = vmatpush.bf16.msra.mxu0 0
      %417 = vmatpush.bf16.msra.mxu0 0
      %418 = vmatpush.bf16.msra.mxu0 0
      %419 = vmatpush.bf16.msra.mxu0 0
      %420 = vmatpush.bf16.msra.mxu0 0
      %421 = vmatpush.bf16.msra.mxu0 %v391
      %422 = vmatmul.bf16.gmra.mxu0 %v412
      %v423 = vpop.f32.mrf.mxu0
      %v424 = vadd.f32 %v399, %v423
      %v425 = vpop.f32.mrf.mxu0
      %v426 = vadd.f32 %v404, %v425
      %427 = vdwg.mxu0
      %428 = vmatpush.bf16.msra.mxu0 0
      %429 = vmatpush.bf16.msra.mxu0 0
      %430 = vmatpush.bf16.msra.mxu0 0
      %431 = vmatpush.bf16.msra.mxu0 0
      %432 = vmatpush.bf16.msra.mxu0 0
      %433 = vmatpush.bf16.msra.mxu0 0
      %434 = vmatpush.bf16.msra.mxu0 0
      %435 = vmatpush.bf16.msra.mxu0 %v392
      %436 = vmatmul.bf16.gmra.mxu0 %v412
      %v437 = vpop.f32.mrf.mxu0
      %v438 = vadd.f32 %v399, %v437
      %v439 = vpop.f32.mrf.mxu0
      %v440 = vadd.f32 %v404, %v439
      %441 = vdwg.mxu0
      %v442 = vadd.f32 %v211, %v424
      %v443 = vadd.f32 %v212, %v438
      %v444 = vadd.f32 %v213, %v426
      %v445 = vadd.f32 %v214, %v440
      %446 = vst [vmem:[%s208] sm:$0xff] %v442
      %447 = vst [vmem:[%s208 + $0x8] sm:$0xff] %v443
      %448 = vst [vmem:[%s208 + $0x10] sm:$0xff] %v444
      %449 = vst [vmem:[%s208 + $0x18] sm:$0xff] %v445
      %s450 = smul.u32 2, %s19
      %p451 = scmp.lt.s32.totalorder %s18, 1
      %s452 = scalar_select %p451, %s18, 1
      %p453 = scmp.lt.s32.totalorder %s450, 1
      %s454 = scalar_select %p453, %s450, 1
      %s455 = smul.addr %s452, 4
      %s456 = sadd.s32 %s454, %s455
      %s457 = smul.addr %s456, 8
      %s458 = scalar_lea.vmem %s3, %s457
      // Predicated region
      $region33: #{channel_dae_forward.1} parent=31 // pred_check
        %p459 = pneg %p116
      $region34: #{channel_dae_forward.1} parent=31 // pred_check_branch
        %461 = sbr.rel (%p459) target = $region36
      $region35: #{channel_dae_forward.1} parent=31 // pred_region
        %s462 = smul.u32 2, %s19
      $region36: #{channel_dae_forward.1} parent=31 // pred_fallthru
        _
    $region32: #{channel_dae_forward.1} parent=5 // pred_fallthru
      _
    %p463 = scmp.le.s32.totalorder 2, %s9
    // Predicated region
    $region37: #{channel_dae_forward.1} parent=5 // pred_check
      %p464 = pneg %p463
    $region38: #{channel_dae_forward.1} parent=5 // pred_check_branch
      %466 = sbr.rel (%p464) target = $region40
    $region39: #{channel_dae_forward.1} parent=5 // pred_region
      %s467 = ssub.s32 %s9, 2
      // Predicated region
      $region41: #{channel_dae_forward.1} parent=39 // pred_check
        %p468 = pneg %p122
      $region42: #{channel_dae_forward.1} parent=39 // pred_check_branch
        %470 = sbr.rel (%p468) target = $region44
      $region43: #{channel_dae_forward.1} parent=39 // pred_region
        %s471 = smul.u32 2, %s21
        %p472 = scmp.lt.s32.totalorder %s20, 1
        %s473 = scalar_select %p472, %s20, 1
        %p474 = scmp.lt.s32.totalorder %s471, 1
        %s475 = scalar_select %p474, %s471, 1
        %s476 = smul.addr %s473, 4
        %s477 = sadd.s32 %s475, %s476
        %s478 = smul.addr %s477, 8
        %s479 = scalar_lea.vmem %s3, %s478
      $region44: #{channel_dae_forward.1} parent=39 // pred_fallthru
        _
    $region40: #{channel_dae_forward.1} parent=5 // pred_fallthru
      _
  $region6: #{channel_dae_forward.1} parent=0 // loop_footer
    %s13 = sadd.s32 1, %s9
  $region7: #{channel_dae_forward.1} parent=0 // loop_footer_branch
    %8 = sbr.rel target = $region3
  $region8: #{channel_dae_forward.1} parent=0 // loop_exit
    _

</llo_original>
